<compile_context>
chip_gen: v5e
topology: v5e:2x2
jax: 0.10.0
libtpu: 0.0.40
codegen_flags: <defaults>
</compile_context>

<pallas_src>
import jax
import jax.numpy as jnp
from jax.experimental import pallas as pl
from jax.experimental.pallas import tpu as pltpu


def _round_up(x, m):
    return (x + m - 1) // m * m


def _detect_num_tensorcores():
    # v7x chips have 2 TensorCores; v5e/v6e have 1.  Detection failure -> 1.
    try:
        kind = jax.devices()[0].device_kind.lower()
        if "v7" in kind or "7x" in kind:
            return 2
    except Exception:
        pass
    return 1


# ---------------------------------------------------------------------------
# Fused kernel (whole network, one batch tile per grid step)
# ---------------------------------------------------------------------------
def _make_fused_kernel(num_blocks, lengths, compute_dtype):
    """lengths[bi] = sequence length entering conv block bi."""

    def kernel(*refs):
        x_ref = refs[0]                          # (nt, L0+2, Cin0p) halo-padded, compute_dtype
        blk_refs = refs[1:1 + 2 * num_blocks]    # per block: w2 (3*Cinp, Cp), shift (1, Cp)
        wl_ref = refs[1 + 2 * num_blocks]        # (E_pad, O_pad) permuted linear weight
        bl_ref = refs[2 + 2 * num_blocks]        # (1, O_pad) f32
        o_ref = refs[3 + 2 * num_blocks]         # (1, nt, O_pad)
        pad_ref = refs[4 + 2 * num_blocks]       # (nt, L0//2+2, Cp) staged (haloed) activations
        pool_ref = refs[5 + 2 * num_blocks]      # (nt*L0, Cp) f32 pre-pool conv output

        nt = x_ref.shape[0]
        chid_pad = pool_ref.shape[1]

        pooled = None
        for bi in range(num_blocks):             # static unroll over conv blocks
            w_ref = blk_refs[2 * bi]             # (3*Cinp, Cp), BN scale already folded in
            shift = blk_refs[2 * bi + 1][...]    # (1, Cp) fused conv-bias + BN shift (f32)
            length = lengths[bi]
            rows = nt * length

            if bi == 0:
                src = x_ref                       # input already halo-padded on the host
            else:
                # Stage the pooled activation with a zero halo for this block.
                zero = jnp.zeros((nt, 1, chid_pad), compute_dtype)
                pad_ref[:, 0:1, :] = zero
                pad_ref[:, length + 1:length + 2, :] = zero
                pad_ref[:, 1:length + 1, :] = (
                    pooled.reshape(nt, length, chid_pad).astype(compute_dtype))
                src = pad_ref

            cin = src.shape[2]                    # lane-padded input channels

            # Conv1d(k=3, pad=1): three shifted windows, three accumulating
            # MXU dots against per-tap weight row-slices (no lane concat).
            y = None
            for k in range(3):
                win = src[:, k:k + length, :].reshape(rows, cin)
                w_k = w_ref[k * cin:(k + 1) * cin, :]
                d = jnp.dot(win, w_k, preferred_element_type=jnp.float32)
                y = d if y is None else y + d

            # Folded conv-bias + BatchNorm(eval) shift (scale folded into w), ReLU.
            y = jnp.maximum(y + shift, 0.0)       # f32 VPU math (v5e-safe)

            # MaxPool1d(2): stage to scratch, stride-2 sublane reads, pairwise max.
            pool_ref[0:rows, :] = y
            half = rows // 2
            pooled = jnp.maximum(pool_ref[pl.ds(0, half, stride=2), :],
                                 pool_ref[pl.ds(1, half, stride=2), :])

        # Channels-last flatten; the Linear weight rows were permuted/padded at
        # init so this matches nn.Flatten on the PyTorch NCL tensor exactly.
        lf = lengths[-1] // 2
        feat = pooled.reshape(nt, lf * chid_pad).astype(compute_dtype)
        out = jnp.dot(feat, wl_ref[...],
                      preferred_element_type=jnp.float32) + bl_ref[...]
        o_ref[0] = out.astype(o_ref.dtype)

    return kernel


# ---------------------------------------------------------------------------
# Wrapper
# ---------------------------------------------------------------------------
def cnn_forward(params, x_ncl, *, batch_tile=None, num_tensorcores=None,
                vmem_budget_bytes=20 * 2 ** 20):
    """Forward pass. x_ncl is PyTorch-style (N, C, L)."""
    meta = params["meta"]
    cdt = meta["compute_dtype"]
    blocks = params["blocks"]
    nb = len(blocks)
    N, cin, L0 = x_ncl.shape
    assert cin == meta["in_chn"]
    assert L0 % (2 ** nb) == 0, "each MaxPool1d(2) stage needs an even length"
    Lf = L0 >> nb
    assert meta["embedding_size"] == meta["hidden_chn"] * Lf

    cin0_pad, chid_pad, o_pad = meta["cin0_pad"], meta["chid_pad"], meta["o_pad"]
    E_pad = Lf * chid_pad
    assert params["linear_w"].shape == (E_pad, o_pad)

    # --- derive batch_tile from an explicit VMEM residency budget -----------
    isz = jnp.dtype(cdt).itemsize
    per_sample = (2 * (L0 + 2) * cin0_pad * isz          # double-buffered input block
                  + (L0 // 2 + 2) * chid_pad * isz       # pad_ref scratch
                  + L0 * chid_pad * 4                    # pool_ref scratch
                  + 2 * o_pad * 4                        # double-buffered output block
                  + L0 * (cin0_pad + chid_pad) * isz     # live window values
                  + L0 * chid_pad * 4)                   # live f32 accumulator
    fixed = 0
    for blk in blocks:                                   # weights are double-buffered
        fixed += 2 * (blk["w2"].size * isz + blk["shift"].size * 4)
    fixed += 2 * (params["linear_w"].size * isz + params["linear_b"].size * 4)

    if num_tensorcores is None:
        num_tensorcores = _detect_num_tensorcores()
    if batch_tile is None:
        # One grid step on single-TC chips; >= num_tensorcores steps on v7x.
        cap = (N // num_tensorcores
               if (N % num_tensorcores == 0 and N >= num_tensorcores) else N)
        batch_tile = 1
        for d in range(1, N + 1):
            if N % d == 0 and d <= cap and fixed + d * per_sample <= vmem_budget_bytes:
                batch_tile = d
    assert N % batch_tile == 0
    nt = batch_tile
    grid = (N // nt,)
    vmem_limit = int(min(64 * 2 ** 20,
                         max(32 * 2 ** 20, 2 * (fixed + nt * per_sample))))

    # --- one-time boundary layout work (host/XLA) ----------------------------
    # NCL -> channels-last NLC, zero halo on L, lane-pad channels, cast once.
    x_nlc = jnp.transpose(x_ncl, (0, 2, 1))
    x_pad = jnp.pad(x_nlc, ((0, 0), (1, 1), (0, cin0_pad - cin))).astype(cdt)

    inputs = [x_pad]
    in_specs = [pl.BlockSpec((nt, L0 + 2, cin0_pad), lambda b: (b, 0, 0))]
    for blk in blocks:
        # NOTE: constant-index weight blocks; pl.Buffered(1) would halve their
        # VMEM footprint — left at the default double-buffering for robustness.
        in_specs.append(pl.BlockSpec(blk["w2"].shape, lambda b: (0, 0)))
        in_specs.append(pl.BlockSpec(blk["shift"].shape, lambda b: (0, 0)))
        inputs += [blk["w2"], blk["shift"]]
    in_specs += [pl.BlockSpec((E_pad, o_pad), lambda b: (0, 0)),
                 pl.BlockSpec((1, o_pad), lambda b: (0, 0))]
    inputs += [params["linear_w"], params["linear_b"]]

    lengths = [L0 >> i for i in range(nb)]
    out = pl.pallas_call(
        _make_fused_kernel(nb, lengths, cdt),
        out_shape=jax.ShapeDtypeStruct((N // nt, nt, o_pad), jnp.float32),
        grid=grid,
        in_specs=in_specs,
        out_specs=pl.BlockSpec((1, nt, o_pad), lambda b: (b, 0, 0)),
        scratch_shapes=[
            pltpu.VMEM((nt, L0 // 2 + 2, chid_pad), cdt),   # staged (haloed) activations
            pltpu.VMEM((nt * L0, chid_pad), jnp.float32),   # pre-pool conv output
        ],
        compiler_params=pltpu.CompilerParams(
            dimension_semantics=("parallel",),
            vmem_limit_bytes=vmem_limit),
    )(*inputs)
    return out.reshape(N, o_pad)[:, :meta["out_size"]]


# ---------------------------------------------------------------------------
# Parameter init: PyTorch-shaped tensors, folded / padded / cast once for TPU
# ---------------------------------------------------------------------------
def init_cnn_params(key, in_chn, hidden_chn, cb_num, embedding_size, out_size,
                    compute_dtype=jnp.bfloat16):
    eps = 1e-5
    cin0_pad = _round_up(in_chn, 128)
    chid_pad = _round_up(hidden_chn, 128)
    o_pad = _round_up(out_size, 128)
    Lf = embedding_size // hidden_chn
    assert embedding_size == hidden_chn * Lf

    params = {"blocks": []}
    cins = [in_chn] + [hidden_chn] * (cb_num - 1)
    cpads = [cin0_pad] + [chid_pad] * (cb_num - 1)
    for cin, cpad in zip(cins, cpads):
        cout = hidden_chn
        key, kw, kb, kg, kbe, km, kv = jax.random.split(key, 7)
        w_torch = jax.random.normal(kw, (cout, cin, 3), jnp.float32) * 0.1
        b = jax.random.normal(kb, (cout,), jnp.float32) * 0.1
        gamma = 1.0 + 0.1 * jax.random.normal(kg, (cout,), jnp.float32)
        beta = 0.1 * jax.random.normal(kbe, (cout,), jnp.float32)
        rmean = 0.1 * jax.random.normal(km, (cout,), jnp.float32)
        rvar = jax.random.uniform(kv, (cout,), jnp.float32, minval=0.5, maxval=1.5)
        scale = gamma / jnp.sqrt(rvar + eps)
        shift = beta + (b - rmean) * scale
        # Fold the BN scale into the conv weight columns, reorder to tap-major
        # (row = k*Cinp + c), zero-pad channels to lane width, pre-cast.
        w_tap = jnp.transpose(w_torch * scale[:, None, None], (2, 1, 0))  # (3, cin, cout)
        w_tap = jnp.pad(w_tap, ((0, 0), (0, cpad - cin), (0, chid_pad - cout)))
        params["blocks"].append({
            "w2": w_tap.reshape(3 * cpad, chid_pad).astype(compute_dtype),
            "shift": jnp.pad(shift, (0, chid_pad - cout)).reshape(1, chid_pad),
            # reference-only copies (PyTorch layout / semantics)
            "w_torch": w_torch, "scale_ref": scale, "shift_ref": shift,
        })

    key, kw, kb = jax.random.split(key, 3)
    w_lin = jax.random.normal(kw, (out_size, embedding_size), jnp.float32) * 0.1
    b_lin = jax.random.normal(kb, (out_size,), jnp.float32) * 0.1
    # Fold nn.Flatten's channel-major (N, C*Lf) ordering into the weight so the
    # kernel consumes the channels-last (N, Lf*Cp) flatten with no transpose;
    # pad channels/outputs to lane width (padded activations are exactly zero).
    w_nlc = jnp.transpose(w_lin.reshape(out_size, hidden_chn, Lf), (2, 1, 0))  # (Lf, C, O)
    w_nlc = jnp.pad(w_nlc, ((0, 0), (0, chid_pad - hidden_chn), (0, o_pad - out_size)))
    params["linear_w"] = w_nlc.reshape(Lf * chid_pad, o_pad).astype(compute_dtype)
    params["linear_b"] = jnp.pad(b_lin, (0, o_pad - out_size)).reshape(1, o_pad)
    params["linear_w_torch"] = w_lin
    params["linear_b_torch"] = b_lin
    params["meta"] = dict(in_chn=in_chn, hidden_chn=hidden_chn, cb_num=cb_num,
                          embedding_size=embedding_size, out_size=out_size,
                          cin0_pad=cin0_pad, chid_pad=chid_pad, o_pad=o_pad,
                          compute_dtype=compute_dtype)
    return params


# ---------------------------------------------------------------------------
# Pure-JAX reference (PyTorch semantics, NCL layout) for a correctness check
# ---------------------------------------------------------------------------
def cnn_reference(params, x_ncl):
    x = x_ncl.astype(jnp.float32)
    for blk in params["blocks"]:
        w = blk["w_torch"]                              # (Cout, Cin, 3)
        L = x.shape[2]
        xp = jnp.pad(x, ((0, 0), (0, 0), (1, 1)))
        y = jnp.zeros((x.shape[0], w.shape[0], L), jnp.float32)
        for k in range(3):
            y = y + jnp.einsum("ncl,oc->nol", xp[:, :, k:k + L], w[:, :, k])
        y = y * blk["scale_ref"].reshape(1, -1, 1) + blk["shift_ref"].reshape(1, -1, 1)
        y = jnp.maximum(y, 0.0)
        x = jnp.maximum(y[:, :, 0::2], y[:, :, 1::2])   # MaxPool1d(2)
    feat = x.reshape(x.shape[0], -1)                    # nn.Flatten on NCL
    return feat @ params["linear_w_torch"].T + params["linear_b_torch"]


# ---------------------------------------------------------------------------
if __name__ == "__main__":
    N, in_chn, L = 2, 4, 16
    hidden_chn, cb_num, out_size = 8, 2, 5
    # after cb_num=2 pools: L -> 16/2/2 = 4, embedding = hidden_chn * 4 = 32
    embedding_size = hidden_chn * (L // (2 ** cb_num))

    key = jax.random.PRNGKey(0)
    key, kx = jax.random.split(key)
    x = jax.random.normal(kx, (N, in_chn, L), jnp.float32)

    params = init_cnn_params(key, in_chn, hidden_chn, cb_num,
                             embedding_size, out_size)

    out = cnn_forward(params, x)
    out = jax.block_until_ready(out)
    assert out.shape == (N, out_size), out.shape

    ref = cnn_reference(params, x)
    err = float(jnp.max(jnp.abs(out - ref)))
    assert jnp.allclose(out, ref, rtol=3e-2, atol=3e-2), err

    print("KERNEL_OK")
</pallas_src>

<mosaic_0001>
module attributes {stable_mosaic.version = 11 : i64} {
  func.func @kernel(%arg0: i32, %arg1: memref<2x18x128xbf16, #tpu.memory_space<vmem>>, %arg2: memref<384x128xbf16, #tpu.memory_space<vmem>>, %arg3: memref<1x128xf32, #tpu.memory_space<vmem>>, %arg4: memref<384x128xbf16, #tpu.memory_space<vmem>>, %arg5: memref<1x128xf32, #tpu.memory_space<vmem>>, %arg6: memref<512x128xbf16, #tpu.memory_space<vmem>>, %arg7: memref<1x128xf32, #tpu.memory_space<vmem>>, %arg8: memref<1x2x128xf32, #tpu.memory_space<vmem>>, %arg9: memref<2x10x128xbf16, #tpu.memory_space<vmem>>, %arg10: memref<32x128xf32, #tpu.memory_space<vmem>>) attributes {dimension_semantics = [#tpu.dimension_semantics<parallel>], iteration_bounds = array<i64: 1>, scalar_prefetch = 0 : i64, scratch_operands = 2 : i64, tpu.core_type = #tpu.core_type<tc>, window_params = [{transform_indices = @transform_0, window_bounds = array<i64: 2, 18, 128>}, {pipeline_mode = #tpu.pipeline_mode<synchronous>, transform_indices = @transform_1, window_bounds = array<i64: 384, 128>}, {pipeline_mode = #tpu.pipeline_mode<synchronous>, transform_indices = @transform_2, window_bounds = array<i64: 1, 128>}, {pipeline_mode = #tpu.pipeline_mode<synchronous>, transform_indices = @transform_3, window_bounds = array<i64: 384, 128>}, {pipeline_mode = #tpu.pipeline_mode<synchronous>, transform_indices = @transform_4, window_bounds = array<i64: 1, 128>}, {pipeline_mode = #tpu.pipeline_mode<synchronous>, transform_indices = @transform_5, window_bounds = array<i64: 512, 128>}, {pipeline_mode = #tpu.pipeline_mode<synchronous>, transform_indices = @transform_6, window_bounds = array<i64: 1, 128>}, {transform_indices = @transform_7, window_bounds = array<i64: 1, 2, 128>}]} {
    %c0 = arith.constant 0 : index
    %c0_0 = arith.constant 0 : index
    %0 = vector.load %arg3[%c0, %c0_0] : memref<1x128xf32, #tpu.memory_space<vmem>>, vector<1x128xf32>
    %c0_1 = arith.constant 0 : index
    %c0_2 = arith.constant 0 : index
    %c0_3 = arith.constant 0 : index
    %1 = vector.load %arg1[%c0_1, %c0_2, %c0_3] : memref<2x18x128xbf16, #tpu.memory_space<vmem>>, vector<2x16x128xbf16>
    %2 = vector.shape_cast %1 : vector<2x16x128xbf16> to vector<32x128xbf16>
    %c0_4 = arith.constant 0 : index
    %c0_5 = arith.constant 0 : index
    %3 = vector.load %arg2[%c0_4, %c0_5] : memref<384x128xbf16, #tpu.memory_space<vmem>>, vector<128x128xbf16>
    %cst = arith.constant dense<0.000000e+00> : vector<32x128xf32>
    %4 = tpu.matmul %2, %3, %cst {dimension_numbers = #tpu.dot_dimension_numbers<[1], [0], [0], [1], [0, 0, 1, 1], [], []>} : vector<32x128xbf16>, vector<128x128xbf16>, vector<32x128xf32> -> vector<32x128xf32>
    %c0_6 = arith.constant 0 : index
    %c1 = arith.constant 1 : index
    %c0_7 = arith.constant 0 : index
    %5 = vector.load %arg1[%c0_6, %c1, %c0_7] : memref<2x18x128xbf16, #tpu.memory_space<vmem>>, vector<2x16x128xbf16>
    %6 = vector.shape_cast %5 : vector<2x16x128xbf16> to vector<32x128xbf16>
    %c128 = arith.constant 128 : index
    %c0_8 = arith.constant 0 : index
    %7 = vector.load %arg2[%c128, %c0_8] : memref<384x128xbf16, #tpu.memory_space<vmem>>, vector<128x128xbf16>
    %cst_9 = arith.constant dense<0.000000e+00> : vector<32x128xf32>
    %8 = tpu.matmul %6, %7, %cst_9 {dimension_numbers = #tpu.dot_dimension_numbers<[1], [0], [0], [1], [0, 0, 1, 1], [], []>} : vector<32x128xbf16>, vector<128x128xbf16>, vector<32x128xf32> -> vector<32x128xf32>
    %9 = arith.addf %4, %8 : vector<32x128xf32>
    %c0_10 = arith.constant 0 : index
    %c2 = arith.constant 2 : index
    %c0_11 = arith.constant 0 : index
    %10 = vector.load %arg1[%c0_10, %c2, %c0_11] : memref<2x18x128xbf16, #tpu.memory_space<vmem>>, vector<2x16x128xbf16>
    %11 = vector.shape_cast %10 : vector<2x16x128xbf16> to vector<32x128xbf16>
    %c256 = arith.constant 256 : index
    %c0_12 = arith.constant 0 : index
    %12 = vector.load %arg2[%c256, %c0_12] : memref<384x128xbf16, #tpu.memory_space<vmem>>, vector<128x128xbf16>
    %cst_13 = arith.constant dense<0.000000e+00> : vector<32x128xf32>
    %13 = tpu.matmul %11, %12, %cst_13 {dimension_numbers = #tpu.dot_dimension_numbers<[1], [0], [0], [1], [0, 0, 1, 1], [], []>} : vector<32x128xbf16>, vector<128x128xbf16>, vector<32x128xf32> -> vector<32x128xf32>
    %14 = arith.addf %9, %13 : vector<32x128xf32>
    %15 = vector.broadcast %0 : vector<1x128xf32> to vector<32x128xf32>
    %16 = arith.addf %14, %15 : vector<32x128xf32>
    %cst_14 = arith.constant 0.000000e+00 : f32
    %17 = vector.broadcast %cst_14 : f32 to vector<32x128xf32>
    %18 = arith.maximumf %16, %17 : vector<32x128xf32>
    %c0_15 = arith.constant 0 : index
    %c0_16 = arith.constant 0 : index
    %19 = vector.load %arg10[%c0_15, %c0_16] : memref<32x128xf32, #tpu.memory_space<vmem>>, vector<32x128xf32>
    tpu.vector_store %arg10[%c0_15, %c0_16], %18 {strides = array<i32>} : memref<32x128xf32, #tpu.memory_space<vmem>>, vector<32x128xf32>,
    %c0_17 = arith.constant 0 : index
    %c0_18 = arith.constant 0 : index
    %20 = tpu.strided_load %arg10[%c0_17, %c0_18] {strides = array<i32: 2, 1>} : memref<32x128xf32, #tpu.memory_space<vmem>>, vector<16x128xf32>
    %c1_19 = arith.constant 1 : index
    %c0_20 = arith.constant 0 : index
    %21 = tpu.strided_load %arg10[%c1_19, %c0_20] {strides = array<i32: 2, 1>} : memref<32x128xf32, #tpu.memory_space<vmem>>, vector<16x128xf32>
    %22 = arith.maximumf %20, %21 : vector<16x128xf32>
    %c0_21 = arith.constant 0 : index
    %c0_22 = arith.constant 0 : index
    %23 = vector.load %arg5[%c0_21, %c0_22] : memref<1x128xf32, #tpu.memory_space<vmem>>, vector<1x128xf32>
    %cst_23 = arith.constant 0.000000e+00 : bf16
    %24 = vector.broadcast %cst_23 : bf16 to vector<2x1x128xbf16>
    %c0_24 = arith.constant 0 : index
    %c0_25 = arith.constant 0 : index
    %c0_26 = arith.constant 0 : index
    %25 = vector.load %arg9[%c0_24, %c0_25, %c0_26] : memref<2x10x128xbf16, #tpu.memory_space<vmem>>, vector<2x1x128xbf16>
    tpu.vector_store %arg9[%c0_24, %c0_25, %c0_26], %24 {strides = array<i32>} : memref<2x10x128xbf16, #tpu.memory_space<vmem>>, vector<2x1x128xbf16>,
    %c0_27 = arith.constant 0 : index
    %c9 = arith.constant 9 : index
    %c0_28 = arith.constant 0 : index
    %26 = vector.load %arg9[%c0_27, %c9, %c0_28] : memref<2x10x128xbf16, #tpu.memory_space<vmem>>, vector<2x1x128xbf16>
    tpu.vector_store %arg9[%c0_27, %c9, %c0_28], %24 {strides = array<i32>} : memref<2x10x128xbf16, #tpu.memory_space<vmem>>, vector<2x1x128xbf16>,
    %27 = vector.shape_cast %22 : vector<16x128xf32> to vector<2x8x128xf32>
    %28 = arith.truncf %27 : vector<2x8x128xf32> to vector<2x8x128xbf16>
    %c0_29 = arith.constant 0 : index
    %c1_30 = arith.constant 1 : index
    %c0_31 = arith.constant 0 : index
    %29 = vector.load %arg9[%c0_29, %c1_30, %c0_31] : memref<2x10x128xbf16, #tpu.memory_space<vmem>>, vector<2x8x128xbf16>
    tpu.vector_store %arg9[%c0_29, %c1_30, %c0_31], %28 {strides = array<i32>} : memref<2x10x128xbf16, #tpu.memory_space<vmem>>, vector<2x8x128xbf16>,
    %c0_32 = arith.constant 0 : index
    %c0_33 = arith.constant 0 : index
    %c0_34 = arith.constant 0 : index
    %30 = vector.load %arg9[%c0_32, %c0_33, %c0_34] : memref<2x10x128xbf16, #tpu.memory_space<vmem>>, vector<2x8x128xbf16>
    %31 = vector.shape_cast %30 : vector<2x8x128xbf16> to vector<16x128xbf16>
    %c0_35 = arith.constant 0 : index
    %c0_36 = arith.constant 0 : index
    %32 = vector.load %arg4[%c0_35, %c0_36] : memref<384x128xbf16, #tpu.memory_space<vmem>>, vector<128x128xbf16>
    %cst_37 = arith.constant dense<0.000000e+00> : vector<16x128xf32>
    %33 = tpu.matmul %31, %32, %cst_37 {dimension_numbers = #tpu.dot_dimension_numbers<[1], [0], [0], [1], [0, 0, 1, 1], [], []>} : vector<16x128xbf16>, vector<128x128xbf16>, vector<16x128xf32> -> vector<16x128xf32>
    %c0_38 = arith.constant 0 : index
    %c1_39 = arith.constant 1 : index
    %c0_40 = arith.constant 0 : index
    %34 = vector.load %arg9[%c0_38, %c1_39, %c0_40] : memref<2x10x128xbf16, #tpu.memory_space<vmem>>, vector<2x8x128xbf16>
    %35 = vector.shape_cast %34 : vector<2x8x128xbf16> to vector<16x128xbf16>
    %c128_41 = arith.constant 128 : index
    %c0_42 = arith.constant 0 : index
    %36 = vector.load %arg4[%c128_41, %c0_42] : memref<384x128xbf16, #tpu.memory_space<vmem>>, vector<128x128xbf16>
    %cst_43 = arith.constant dense<0.000000e+00> : vector<16x128xf32>
    %37 = tpu.matmul %35, %36, %cst_43 {dimension_numbers = #tpu.dot_dimension_numbers<[1], [0], [0], [1], [0, 0, 1, 1], [], []>} : vector<16x128xbf16>, vector<128x128xbf16>, vector<16x128xf32> -> vector<16x128xf32>
    %38 = arith.addf %33, %37 : vector<16x128xf32>
    %c0_44 = arith.constant 0 : index
    %c2_45 = arith.constant 2 : index
    %c0_46 = arith.constant 0 : index
    %39 = vector.load %arg9[%c0_44, %c2_45, %c0_46] : memref<2x10x128xbf16, #tpu.memory_space<vmem>>, vector<2x8x128xbf16>
    %40 = vector.shape_cast %39 : vector<2x8x128xbf16> to vector<16x128xbf16>
    %c256_47 = arith.constant 256 : index
    %c0_48 = arith.constant 0 : index
    %41 = vector.load %arg4[%c256_47, %c0_48] : memref<384x128xbf16, #tpu.memory_space<vmem>>, vector<128x128xbf16>
    %cst_49 = arith.constant dense<0.000000e+00> : vector<16x128xf32>
    %42 = tpu.matmul %40, %41, %cst_49 {dimension_numbers = #tpu.dot_dimension_numbers<[1], [0], [0], [1], [0, 0, 1, 1], [], []>} : vector<16x128xbf16>, vector<128x128xbf16>, vector<16x128xf32> -> vector<16x128xf32>
    %43 = arith.addf %38, %42 : vector<16x128xf32>
    %44 = vector.broadcast %23 : vector<1x128xf32> to vector<16x128xf32>
    %45 = arith.addf %43, %44 : vector<16x128xf32>
    %cst_50 = arith.constant 0.000000e+00 : f32
    %46 = vector.broadcast %cst_50 : f32 to vector<16x128xf32>
    %47 = arith.maximumf %45, %46 : vector<16x128xf32>
    %c0_51 = arith.constant 0 : index
    %c0_52 = arith.constant 0 : index
    %48 = vector.load %arg10[%c0_51, %c0_52] : memref<32x128xf32, #tpu.memory_space<vmem>>, vector<16x128xf32>
    tpu.vector_store %arg10[%c0_51, %c0_52], %47 {strides = array<i32>} : memref<32x128xf32, #tpu.memory_space<vmem>>, vector<16x128xf32>,
    %c0_53 = arith.constant 0 : index
    %c0_54 = arith.constant 0 : index
    %49 = tpu.strided_load %arg10[%c0_53, %c0_54] {strides = array<i32: 2, 1>} : memref<32x128xf32, #tpu.memory_space<vmem>>, vector<8x128xf32>
    %c1_55 = arith.constant 1 : index
    %c0_56 = arith.constant 0 : index
    %50 = tpu.strided_load %arg10[%c1_55, %c0_56] {strides = array<i32: 2, 1>} : memref<32x128xf32, #tpu.memory_space<vmem>>, vector<8x128xf32>
    %51 = arith.maximumf %49, %50 : vector<8x128xf32>
    %52 = vector.shape_cast %51 : vector<8x128xf32> to vector<2x512xf32>
    %53 = arith.truncf %52 : vector<2x512xf32> to vector<2x512xbf16>
    %c0_57 = arith.constant 0 : index
    %c0_58 = arith.constant 0 : index
    %54 = vector.load %arg6[%c0_57, %c0_58] : memref<512x128xbf16, #tpu.memory_space<vmem>>, vector<512x128xbf16>
    %cst_59 = arith.constant dense<0.000000e+00> : vector<2x128xf32>
    %55 = tpu.matmul %53, %54, %cst_59 {dimension_numbers = #tpu.dot_dimension_numbers<[1], [0], [0], [1], [0, 0, 1, 1], [], []>} : vector<2x512xbf16>, vector<512x128xbf16>, vector<2x128xf32> -> vector<2x128xf32>
    %c0_60 = arith.constant 0 : index
    %c0_61 = arith.constant 0 : index
    %56 = vector.load %arg7[%c0_60, %c0_61] : memref<1x128xf32, #tpu.memory_space<vmem>>, vector<1x128xf32>
    %57 = vector.broadcast %56 : vector<1x128xf32> to vector<2x128xf32>
    %58 = arith.addf %55, %57 : vector<2x128xf32>
    %c0_62 = arith.constant 0 : index
    %c0_63 = arith.constant 0 : index
    %c0_64 = arith.constant 0 : index
    %59 = vector.load %arg8[%c0_62, %c0_63, %c0_64] : memref<1x2x128xf32, #tpu.memory_space<vmem>>, vector<1x2x128xf32>
    %60 = vector.shape_cast %59 : vector<1x2x128xf32> to vector<2x128xf32>
    %61 = vector.shape_cast %58 : vector<2x128xf32> to vector<1x2x128xf32>
    tpu.vector_store %arg8[%c0_62, %c0_63, %c0_64], %61 {strides = array<i32>} : memref<1x2x128xf32, #tpu.memory_space<vmem>>, vector<1x2x128xf32>,
    return
  }
  func.func @transform_0(%arg0: i32) -> (i32, i32, i32) {
    %c0_i32 = arith.constant 0 : i32
    %c0_i32_0 = arith.constant 0 : i32
    %c0_i32_1 = arith.constant 0 : i32
    return %arg0, %c0_i32, %c0_i32_0 : i32, i32, i32
  }
  func.func @transform_1(%arg0: i32) -> (i32, i32) {
    %c0_i32 = arith.constant 0 : i32
    %c0_i32_0 = arith.constant 0 : i32
    %c0_i32_1 = arith.constant 0 : i32
    return %c0_i32, %c0_i32_0 : i32, i32
  }
  func.func @transform_2(%arg0: i32) -> (i32, i32) {
    %c0_i32 = arith.constant 0 : i32
    %c0_i32_0 = arith.constant 0 : i32
    %c0_i32_1 = arith.constant 0 : i32
    return %c0_i32, %c0_i32_0 : i32, i32
  }
  func.func @transform_3(%arg0: i32) -> (i32, i32) {
    %c0_i32 = arith.constant 0 : i32
    %c0_i32_0 = arith.constant 0 : i32
    %c0_i32_1 = arith.constant 0 : i32
    return %c0_i32, %c0_i32_0 : i32, i32
  }
  func.func @transform_4(%arg0: i32) -> (i32, i32) {
    %c0_i32 = arith.constant 0 : i32
    %c0_i32_0 = arith.constant 0 : i32
    %c0_i32_1 = arith.constant 0 : i32
    return %c0_i32, %c0_i32_0 : i32, i32
  }
  func.func @transform_5(%arg0: i32) -> (i32, i32) {
    %c0_i32 = arith.constant 0 : i32
    %c0_i32_0 = arith.constant 0 : i32
    %c0_i32_1 = arith.constant 0 : i32
    return %c0_i32, %c0_i32_0 : i32, i32
  }
  func.func @transform_6(%arg0: i32) -> (i32, i32) {
    %c0_i32 = arith.constant 0 : i32
    %c0_i32_0 = arith.constant 0 : i32
    %c0_i32_1 = arith.constant 0 : i32
    return %c0_i32, %c0_i32_0 : i32, i32
  }
  func.func @transform_7(%arg0: i32) -> (i32, i32, i32) {
    %c0_i32 = arith.constant 0 : i32
    %c0_i32_0 = arith.constant 0 : i32
    %c0_i32_1 = arith.constant 0 : i32
    return %arg0, %c0_i32, %c0_i32_0 : i32, i32, i32
  }
}

</mosaic_0001>

<llo_original>
// kernel: tpu_custom_call.1
$region0: #{tpu_custom_call.1}
  #allocation0 [shape = 'u32[]', space=smem, size = 0x4, offset = 0x4, fixed_abs, tag = 'smem constant byte address 0x4 - core index']
  #allocation1 [shape = 'u32[72,128]{1,0:T(1,128)}', space=vmem, size = 0x9000, scoped, tag = 'internal scratch']
  #allocation2 [shape = 'bf16[2,10,128]{2,1,0:T(8,128)(2,1)}', space=vmem, size = 0x2000, scoped, tag = 'scratch operand']
  #allocation3 [shape = 'f32[32,128]{1,0:T(8,128)}', space=vmem, size = 0x4000, scoped, tag = 'scratch operand']
  %s0 = inlined_call_operand.vmem [shape: bf16[2,18,128], index: 0, kind: input, shape index: {}]
  %s1 = inlined_call_operand.hbm [shape: bf16[384,128], index: 1, kind: input, shape index: {}]
  %s2 = inlined_call_operand.vmem [shape: f32[1,128], index: 2, kind: input, shape index: {}]
  %s3 = inlined_call_operand.hbm [shape: bf16[384,128], index: 3, kind: input, shape index: {}]
  %s4 = inlined_call_operand.vmem [shape: f32[1,128], index: 4, kind: input, shape index: {}]
  %s5 = inlined_call_operand.hbm [shape: bf16[512,128], index: 5, kind: input, shape index: {}]
  %s6 = inlined_call_operand.vmem [shape: f32[1,128], index: 6, kind: input, shape index: {}]
  %s7 = inlined_call_operand.hbm [shape: f32[1,2,128], index: 7, kind: output, shape index: {}]
  %s8 = sld [smem:[#allocation0]]
  $region50: #{tpu_custom_call.1} parent=0
    _
  %s10 = ssub.s32 1, %s8
  %s11 = scalar_select 0, %s10, %s8
  $region1: #{tpu_custom_call.1} parent=0
    #allocation4 [shape = 'u8[98304]{0}', space=vmem, size = 0x18000, scoped, tag = 'input window, operand 1, single buffered']
    #allocation5 [shape = 's32[1]{0}', space=sflag, size = 0x4, scoped, tag = 'scoped memory for tpu_custom_call.1']
    #allocation6 [shape = 's32[1]{0}', space=sflag, size = 0x4, scoped, tag = 'scoped memory for tpu_custom_call.1']
    #allocation7 [shape = 'u8[98304]{0}', space=vmem, size = 0x18000, scoped, tag = 'input window, operand 3, single buffered']
    #allocation8 [shape = 's32[1]{0}', space=sflag, size = 0x4, scoped, tag = 'scoped memory for tpu_custom_call.1']
    #allocation9 [shape = 'u8[131072]{0}', space=vmem, size = 0x20000, scoped, tag = 'input window, operand 5, single buffered']
    #allocation10 [shape = 'u8[1024]{0}', space=vmem, size = 0x400, scoped, tag = 'output window, operand 0, single buffered']
    %12 = vsyncpa [#allocation5], 0
    %13 = vsyncpa [#allocation8], 0
    %14 = vsyncpa [#allocation6], 0
    // Predicated region
    $region2: #{tpu_custom_call.1} parent=1 // pred_check
      _
    $region3: #{tpu_custom_call.1} parent=1 // pred_check_branch
      %16 = sbr.rel (0) target = $region5
    $region4: #{tpu_custom_call.1} parent=1 // pred_region
      _
    $region5: #{tpu_custom_call.1} parent=1 // pred_fallthru
      _
    // Predicated region
    $region6: #{tpu_custom_call.1} parent=1 // pred_check
      _
    $region7: #{tpu_custom_call.1} parent=1 // pred_check_branch
      %18 = sbr.rel (0) target = $region9
    $region8: #{tpu_custom_call.1} parent=1 // pred_region
      %20 = vsyncadd [#allocation5], 0
      %s21 = sshll.u32 %s1, 4
      %s22 = int_to_ptr.hbm [resolvable:$true] %s21
      %s23 = sshll.u32 [#allocation4], 4
      %s24 = int_to_ptr.vmem [resolvable:$true] %s23
      %29 = dma.hbm_to_vmem [thread:$0]  %s22, 3072, %s24, [#allocation5], 64, 64, 4
    $region9: #{tpu_custom_call.1} parent=1 // pred_fallthru
      _
    // Predicated region
    $region10: #{tpu_custom_call.1} parent=1 // pred_check
      _
    $region11: #{tpu_custom_call.1} parent=1 // pred_check_branch
      %31 = sbr.rel (0) target = $region13
    $region12: #{tpu_custom_call.1} parent=1 // pred_region
      _
    $region13: #{tpu_custom_call.1} parent=1 // pred_fallthru
      _
    // Predicated region
    $region14: #{tpu_custom_call.1} parent=1 // pred_check
      _
    $region15: #{tpu_custom_call.1} parent=1 // pred_check_branch
      %33 = sbr.rel (0) target = $region17
    $region16: #{tpu_custom_call.1} parent=1 // pred_region
      %35 = vsyncadd [#allocation8], 0
      %s36 = sshll.u32 %s3, 4
      %s37 = int_to_ptr.hbm [resolvable:$true] %s36
      %s38 = sshll.u32 [#allocation7], 4
      %s39 = int_to_ptr.vmem [resolvable:$true] %s38
      %44 = dma.hbm_to_vmem [thread:$0]  %s37, 3072, %s39, [#allocation8], 64, 64, 4
    $region17: #{tpu_custom_call.1} parent=1 // pred_fallthru
      _
    // Predicated region
    $region18: #{tpu_custom_call.1} parent=1 // pred_check
      _
    $region19: #{tpu_custom_call.1} parent=1 // pred_check_branch
      %46 = sbr.rel (0) target = $region21
    $region20: #{tpu_custom_call.1} parent=1 // pred_region
      _
    $region21: #{tpu_custom_call.1} parent=1 // pred_fallthru
      _
    // Predicated region
    $region22: #{tpu_custom_call.1} parent=1 // pred_check
      _
    $region23: #{tpu_custom_call.1} parent=1 // pred_check_branch
      %48 = sbr.rel (0) target = $region25
    $region24: #{tpu_custom_call.1} parent=1 // pred_region
      %50 = vsyncadd [#allocation8], 0
      %s51 = sshll.u32 %s5, 4
      %s52 = int_to_ptr.hbm [resolvable:$true] %s51
      %s53 = sshll.u32 [#allocation9], 4
      %s54 = int_to_ptr.vmem [resolvable:$true] %s53
      %59 = dma.hbm_to_vmem [thread:$0]  %s52, 4096, %s54, [#allocation8], 64, 64, 4
    $region25: #{tpu_custom_call.1} parent=1 // pred_fallthru
      _
    // Predicated region
    $region26: #{tpu_custom_call.1} parent=1 // pred_check
      _
    $region27: #{tpu_custom_call.1} parent=1 // pred_check_branch
      %61 = sbr.rel (0) target = $region29
    $region28: #{tpu_custom_call.1} parent=1 // pred_region
      _
    $region29: #{tpu_custom_call.1} parent=1 // pred_fallthru
      _
    // Predicated region
    $region30: #{tpu_custom_call.1} parent=1 // pred_check
      _
    $region31: #{tpu_custom_call.1} parent=1 // pred_check_branch
      %63 = sbr.rel (0) target = $region33
    $region32: #{tpu_custom_call.1} parent=1 // pred_region
      %65 = dma.done [#allocation5], 3072
    $region33: #{tpu_custom_call.1} parent=1 // pred_fallthru
      _
    // Predicated region
    $region34: #{tpu_custom_call.1} parent=1 // pred_check
      _
    $region35: #{tpu_custom_call.1} parent=1 // pred_check_branch
      %67 = sbr.rel (0) target = $region37
    $region36: #{tpu_custom_call.1} parent=1 // pred_region
      %69 = dma.done [#allocation8], 3072
    $region37: #{tpu_custom_call.1} parent=1 // pred_fallthru
      _
    // Predicated region
    $region38: #{tpu_custom_call.1} parent=1 // pred_check
      _
    $region39: #{tpu_custom_call.1} parent=1 // pred_check_branch
      %71 = sbr.rel (0) target = $region41
    $region40: #{tpu_custom_call.1} parent=1 // pred_region
      %73 = dma.done [#allocation8], 4096
    $region41: #{tpu_custom_call.1} parent=1 // pred_fallthru
      _
    %v75 = vld [vmem:[%s2] sm:$0x1]
    %v76 = vld [vmem:[%s0] sm:$0xf]
    %v77 = vld [vmem:[%s0 + $0x4] sm:$0xf]
    %v78 = vld [vmem:[%s0 + $0xc] sm:$0xf]
    %v79 = vld [vmem:[%s0 + $0x10] sm:$0xf]
    %v80 = vld [vmem:[#allocation4] sm:$0xf]
    %v81 = vld [vmem:[#allocation4 + $0x4] sm:$0xf]
    %v82 = vld [vmem:[#allocation4 + $0x8] sm:$0xf]
    %v83 = vld [vmem:[#allocation4 + $0xc] sm:$0xf]
    %v84 = vld [vmem:[#allocation4 + $0x10] sm:$0xf]
    %v85 = vld [vmem:[#allocation4 + $0x14] sm:$0xf]
    %v86 = vld [vmem:[#allocation4 + $0x18] sm:$0xf]
    %v87 = vld [vmem:[#allocation4 + $0x1c] sm:$0xf]
    %v88 = vld [vmem:[#allocation4 + $0x20] sm:$0xf]
    %v89 = vld [vmem:[#allocation4 + $0x24] sm:$0xf]
    %v90 = vld [vmem:[#allocation4 + $0x28] sm:$0xf]
    %v91 = vld [vmem:[#allocation4 + $0x2c] sm:$0xf]
    %v92 = vld [vmem:[#allocation4 + $0x30] sm:$0xf]
    %v93 = vld [vmem:[#allocation4 + $0x34] sm:$0xf]
    %v94 = vld [vmem:[#allocation4 + $0x38] sm:$0xf]
    %v95 = vld [vmem:[#allocation4 + $0x3c] sm:$0xf]
    %v96 = vld [vmem:[%s0 + $0x8] sm:$0x1]
    %v97 = vld [vmem:[%s0 + $0x14] sm:$0x1]
    %vm98 = vsmask.f32 3328
    %vm99 = vsmask.f32 7440
    %vm100 = vmor %vm98, %vm99
    %v102 = vshrl.u32 %v76, 16
    %v104 = vrot.slane %v102, 4
    %v105 = vshll.u32 %v76, 16
    %v107 = vrot.slane %v105, 5
    %v108 = vor.u32 %v104, %v107
    %v109 = vrot.slane %v108, 4
    %v111 = vshll.u32 %v77, 16
    %v113 = vrot.slane %v111, 5
    %v114 = vsel %vm100, %v109, %v113
    %v115 = vshrl.u32 %v77, 16
    %v117 = vrot.slane %v115, 4
    %v118 = vor.u32 %v117, %v113
    %v119 = vrot.slane %v118, 4
    %v121 = vshll.u32 %v96, 16
    %v123 = vrot.slane %v121, 5
    %v124 = vsel %vm100, %v119, %v123
    %v126 = vshrl.u32 %v78, 16
    %v128 = vrot.slane %v126, 4
    %v129 = vshll.u32 %v78, 16
    %v131 = vrot.slane %v129, 5
    %v132 = vor.u32 %v128, %v131
    %v133 = vrot.slane %v132, 4
    %v135 = vshll.u32 %v79, 16
    %v137 = vrot.slane %v135, 5
    %v138 = vsel %vm100, %v133, %v137
    %v139 = vshrl.u32 %v79, 16
    %v141 = vrot.slane %v139, 4
    %v142 = vor.u32 %v141, %v137
    %v143 = vrot.slane %v142, 4
    %v145 = vshll.u32 %v97, 16
    %v147 = vrot.slane %v145, 5
    %v148 = vsel %vm100, %v143, %v147
    %v149 = vld [vmem:[#allocation4 + $0x40] sm:$0xf]
    %v150 = vld [vmem:[#allocation4 + $0x44] sm:$0xf]
    %v151 = vld [vmem:[#allocation4 + $0x48] sm:$0xf]
    %v152 = vld [vmem:[#allocation4 + $0x4c] sm:$0xf]
    %v153 = vld [vmem:[#allocation4 + $0x50] sm:$0xf]
    %v154 = vld [vmem:[#allocation4 + $0x54] sm:$0xf]
    %v155 = vld [vmem:[#allocation4 + $0x58] sm:$0xf]
    %v156 = vld [vmem:[#allocation4 + $0x5c] sm:$0xf]
    %v157 = vld [vmem:[#allocation4 + $0x60] sm:$0xf]
    %v158 = vld [vmem:[#allocation4 + $0x64] sm:$0xf]
    %v159 = vld [vmem:[#allocation4 + $0x68] sm:$0xf]
    %v160 = vld [vmem:[#allocation4 + $0x6c] sm:$0xf]
    %v161 = vld [vmem:[#allocation4 + $0x70] sm:$0xf]
    %v162 = vld [vmem:[#allocation4 + $0x74] sm:$0xf]
    %v163 = vld [vmem:[#allocation4 + $0x78] sm:$0xf]
    %v164 = vld [vmem:[#allocation4 + $0x7c] sm:$0xf]
    %v165 = vunpack.c.l.b16 %v114
    %v166 = vunpack.c.l.b16 %v124
    %v167 = vunpack.c.l.b16 %v138
    %v168 = vunpack.c.l.b16 %v148
    %v169 = vpack.c.b16 %v166, %v165
    %v170 = vpack.c.b16 %v168, %v167
    %v189 = vunpack.c.l.b16 %v149
    %v190 = vunpack.c.l.b16 %v150
    %v191 = vunpack.c.l.b16 %v151
    %v192 = vunpack.c.l.b16 %v152
    %v193 = vunpack.c.l.b16 %v153
    %v194 = vunpack.c.l.b16 %v154
    %v195 = vunpack.c.l.b16 %v155
    %v196 = vunpack.c.l.b16 %v156
    %v197 = vunpack.c.l.b16 %v157
    %v198 = vunpack.c.l.b16 %v158
    %v199 = vunpack.c.l.b16 %v159
    %v200 = vunpack.c.l.b16 %v160
    %v201 = vunpack.c.l.b16 %v161
    %v202 = vunpack.c.l.b16 %v162
    %v203 = vunpack.c.l.b16 %v163
    %v204 = vunpack.c.l.b16 %v164
    %v205 = vpack.c.b16 %v190, %v189
    %v206 = vpack.c.b16 %v192, %v191
    %v207 = vpack.c.b16 %v194, %v193
    %v208 = vpack.c.b16 %v196, %v195
    %v209 = vpack.c.b16 %v198, %v197
    %v210 = vpack.c.b16 %v200, %v199
    %v211 = vpack.c.b16 %v202, %v201
    %v212 = vpack.c.b16 %v204, %v203
    %221 = vmatpush.bf16.msra.mxu0 %v212
    %222 = vmatpush.bf16.msra.mxu0 %v211
    %223 = vmatpush.bf16.msra.mxu0 %v210
    %224 = vmatpush.bf16.msra.mxu0 %v209
    %225 = vmatpush.bf16.msra.mxu0 %v208
    %226 = vmatpush.bf16.msra.mxu0 %v207
    %227 = vmatpush.bf16.msra.mxu0 %v206
    %228 = vmatpush.bf16.msra.mxu0 %v205
    %229 = vmatmul.bf16.gmra.mxu0 %v169
    %v230 = vpop.f32.mrf.mxu0
    %v231 = vadd.f32 0.0, %v230
    %v232 = vpop.f32.mrf.mxu0
    %v233 = vadd.f32 0.0, %v232
    %234 = vmatmul.bf16.gmra.mxu0 %v170
    %v235 = vpop.f32.mrf.mxu0
    %v236 = vadd.f32 0.0, %v235
    %v237 = vpop.f32.mrf.mxu0
    %v238 = vadd.f32 0.0, %v237
    %239 = vdwg.mxu0
    %v244 = vunpack.c.l.b16 %v76
    %v245 = vunpack.c.l.b16 %v77
    %v246 = vunpack.c.l.b16 %v78
    %v247 = vunpack.c.l.b16 %v79
    %v248 = vpack.c.b16 %v245, %v244
    %v249 = vpack.c.b16 %v247, %v246
    %v268 = vunpack.c.l.b16 %v80
    %v269 = vunpack.c.l.b16 %v81
    %v270 = vunpack.c.l.b16 %v82
    %v271 = vunpack.c.l.b16 %v83
    %v272 = vunpack.c.l.b16 %v84
    %v273 = vunpack.c.l.b16 %v85
    %v274 = vunpack.c.l.b16 %v86
    %v275 = vunpack.c.l.b16 %v87
    %v276 = vunpack.c.l.b16 %v88
    %v277 = vunpack.c.l.b16 %v89
    %v278 = vunpack.c.l.b16 %v90
    %v279 = vunpack.c.l.b16 %v91
    %v280 = vunpack.c.l.b16 %v92
    %v281 = vunpack.c.l.b16 %v93
    %v282 = vunpack.c.l.b16 %v94
    %v283 = vunpack.c.l.b16 %v95
    %v284 = vpack.c.b16 %v269, %v268
    %v285 = vpack.c.b16 %v271, %v270
    %v286 = vpack.c.b16 %v273, %v272
    %v287 = vpack.c.b16 %v275, %v274
    %v288 = vpack.c.b16 %v277, %v276
    %v289 = vpack.c.b16 %v279, %v278
    %v290 = vpack.c.b16 %v281, %v280
    %v291 = vpack.c.b16 %v283, %v282
    %300 = vmatpush.bf16.msra.mxu0 %v291
    %301 = vmatpush.bf16.msra.mxu0 %v290
    %302 = vmatpush.bf16.msra.mxu0 %v289
    %303 = vmatpush.bf16.msra.mxu0 %v288
    %304 = vmatpush.bf16.msra.mxu0 %v287
    %305 = vmatpush.bf16.msra.mxu0 %v286
    %306 = vmatpush.bf16.msra.mxu0 %v285
    %307 = vmatpush.bf16.msra.mxu0 %v284
    %308 = vmatmul.bf16.gmra.mxu0 %v248
    %v309 = vpop.f32.mrf.mxu0
    %v310 = vadd.f32 %v231, %v309
    %v311 = vpop.f32.mrf.mxu0
    %v312 = vadd.f32 %v233, %v311
    %313 = vmatmul.bf16.gmra.mxu0 %v249
    %v314 = vpop.f32.mrf.mxu0
    %v315 = vadd.f32 %v236, %v314
    %v316 = vpop.f32.mrf.mxu0
    %v317 = vadd.f32 %v238, %v316
    %318 = vdwg.mxu0
    %v319 = vld [vmem:[%s0] sm:$0xe]
    %v320 = vld [vmem:[%s0 + $0xc] sm:$0xe]
    %vm325 = vcmask 1042432
    %vm326 = vcmask 1046532
    %vm327 = vmor %vm325, %vm326
    %v328 = vrot.slane %v319, 5
    %v329 = vrot.slane %v328, 4
    %v330 = vrot.slane %v77, 5
    %v331 = vsel %vm327, %v329, %v330
    %v332 = vrot.slane %v330, 4
    %v333 = vrot.slane %v96, 5
    %v334 = vsel %vm327, %v332, %v333
    %v335 = vrot.slane %v320, 5
    %v336 = vrot.slane %v335, 4
    %v337 = vrot.slane %v79, 5
    %v338 = vsel %vm327, %v336, %v337
    %v339 = vrot.slane %v337, 4
    %v340 = vrot.slane %v97, 5
    %v341 = vsel %vm327, %v339, %v340
    %v342 = vld [vmem:[#allocation4 + $0x80] sm:$0xf]
    %v343 = vld [vmem:[#allocation4 + $0x84] sm:$0xf]
    %v344 = vld [vmem:[#allocation4 + $0x88] sm:$0xf]
    %v345 = vld [vmem:[#allocation4 + $0x8c] sm:$0xf]
    %v346 = vld [vmem:[#allocation4 + $0x90] sm:$0xf]
    %v347 = vld [vmem:[#allocation4 + $0x94] sm:$0xf]
    %v348 = vld [vmem:[#allocation4 + $0x98] sm:$0xf]
    %v349 = vld [vmem:[#allocation4 + $0x9c] sm:$0xf]
    %v350 = vld [vmem:[#allocation4 + $0xa0] sm:$0xf]
    %v351 = vld [vmem:[#allocation4 + $0xa4] sm:$0xf]
    %v352 = vld [vmem:[#allocation4 + $0xa8] sm:$0xf]
    %v353 = vld [vmem:[#allocation4 + $0xac] sm:$0xf]
    %v354 = vld [vmem:[#allocation4 + $0xb0] sm:$0xf]
    %v355 = vld [vmem:[#allocation4 + $0xb4] sm:$0xf]
    %v356 = vld [vmem:[#allocation4 + $0xb8] sm:$0xf]
    %v357 = vld [vmem:[#allocation4 + $0xbc] sm:$0xf]
    %v358 = vunpack.c.l.b16 %v331
    %v359 = vunpack.c.l.b16 %v334
    %v360 = vunpack.c.l.b16 %v338
    %v361 = vunpack.c.l.b16 %v341
    %v362 = vpack.c.b16 %v359, %v358
    %v363 = vpack.c.b16 %v361, %v360
    %v382 = vunpack.c.l.b16 %v342
    %v383 = vunpack.c.l.b16 %v343
    %v384 = vunpack.c.l.b16 %v344
    %v385 = vunpack.c.l.b16 %v345
    %v386 = vunpack.c.l.b16 %v346
    %v387 = vunpack.c.l.b16 %v347
    %v388 = vunpack.c.l.b16 %v348
    %v389 = vunpack.c.l.b16 %v349
    %v390 = vunpack.c.l.b16 %v350
    %v391 = vunpack.c.l.b16 %v351
    %v392 = vunpack.c.l.b16 %v352
    %v393 = vunpack.c.l.b16 %v353
    %v394 = vunpack.c.l.b16 %v354
    %v395 = vunpack.c.l.b16 %v355
    %v396 = vunpack.c.l.b16 %v356
    %v397 = vunpack.c.l.b16 %v357
    %v398 = vpack.c.b16 %v383, %v382
    %v399 = vpack.c.b16 %v385, %v384
    %v400 = vpack.c.b16 %v387, %v386
    %v401 = vpack.c.b16 %v389, %v388
    %v402 = vpack.c.b16 %v391, %v390
    %v403 = vpack.c.b16 %v393, %v392
    %v404 = vpack.c.b16 %v395, %v394
    %v405 = vpack.c.b16 %v397, %v396
    %414 = vmatpush.bf16.msra.mxu0 %v405
    %415 = vmatpush.bf16.msra.mxu0 %v404
    %416 = vmatpush.bf16.msra.mxu0 %v403
    %417 = vmatpush.bf16.msra.mxu0 %v402
    %418 = vmatpush.bf16.msra.mxu0 %v401
    %419 = vmatpush.bf16.msra.mxu0 %v400
    %420 = vmatpush.bf16.msra.mxu0 %v399
    %421 = vmatpush.bf16.msra.mxu0 %v398
    %422 = vmatmul.bf16.gmra.mxu0 %v362
    %v423 = vpop.f32.mrf.mxu0
    %v424 = vadd.f32 0.0, %v423
    %v425 = vpop.f32.mrf.mxu0
    %v426 = vadd.f32 0.0, %v425
    %427 = vmatmul.bf16.gmra.mxu0 %v363
    %v428 = vpop.f32.mrf.mxu0
    %v429 = vadd.f32 0.0, %v428
    %v430 = vpop.f32.mrf.mxu0
    %v431 = vadd.f32 0.0, %v430
    %432 = vdwg.mxu0
    %v433 = vadd.f32 %v310, %v424
    %v434 = vadd.f32 %v312, %v426
    %v435 = vadd.f32 %v315, %v429
    %v436 = vadd.f32 %v317, %v431
    %v438 = vperm.slane %v75, 0
    %v440 = vadd.f32 %v433, %v438
    %v441 = vadd.f32 %v434, %v438
    %v442 = vadd.f32 %v435, %v438
    %v443 = vadd.f32 %v436, %v438
    %v444 = vmax.f32 %v440, 0.0
    %v445 = vmax.f32 %v441, 0.0
    %v446 = vmax.f32 %v442, 0.0
    %v447 = vmax.f32 %v443, 0.0
    %448 = vst [vmem:[#allocation3] sm:$0xff] %v444
    %449 = vst [vmem:[#allocation3 + $0x8] sm:$0xff] %v445
    %450 = vst [vmem:[#allocation3 + $0x10] sm:$0xff] %v446
    %451 = vst [vmem:[#allocation3 + $0x18] sm:$0xff] %v447
    %v452 = vld [vmem:[#allocation3] ss:$2 sm:$0xff]
    %s453 = scalar_lea.vmem [#allocation3], 16
    %v454 = vld [vmem:[%s453] ss:$2 sm:$0xff]
    %s455 = scalar_lea.vmem [#allocation3], 1
    %v456 = vld [vmem:[%s455] ss:$2 sm:$0xff]
    %s457 = scalar_lea.vmem [#allocation3], 17
    %v458 = vld [vmem:[%s457] ss:$2 sm:$0xff]
    %v459 = vmax.f32 %v452, %v456
    %v460 = vmax.f32 %v454, %v458
    %v461 = vld [vmem:[%s4] sm:$0x1]
    %vm462 = vcmask 1040384
    %vm463 = vsmask.f32 256
    %vm464 = vmand %vm462, %vm463
    %v465 = vld [vmem:[#allocation2] sm:$0x1]
    %v466 = vsel %vm464, 0, %v465
    %467 = vst [vmem:[#allocation2] sm:$0x1] %v466
    %v468 = vld [vmem:[#allocation2 + $0x8] sm:$0x1]
    %v469 = vsel %vm464, 0, %v468
    %470 = vst [vmem:[#allocation2 + $0x8] sm:$0x1] %v469
    %vm471 = vsmask.f32 7938
    %vm472 = vmand %vm462, %vm471
    %v473 = vld [vmem:[#allocation2 + $0x4] sm:$0x1]
    %v474 = vsel %vm472, 0, %v473
    %475 = vst [vmem:[#allocation2 + $0x4] sm:$0x1] %v474
    %v476 = vld [vmem:[#allocation2 + $0xc] sm:$0x1]
    %v477 = vsel %vm472, 0, %v476
    %478 = vst [vmem:[#allocation2 + $0xc] sm:$0x1] %v477
    %v479 = vpack.c.bf16 %v459, %v459
    %v480 = vpack.c.bf16 %v460, %v460
    %v482 = vshrl.u32 %v479, 16
    %v484 = vrot.slane %v482, 7
    %v485 = vshll.u32 %v479, 16
    %v487 = vor.u32 %v484, %v485
    %v488 = vrot.slane %v484, 4
    %v490 = vshrl.u32 %v480, 16
    %v492 = vrot.slane %v490, 7
    %v493 = vshll.u32 %v480, 16
    %v495 = vor.u32 %v492, %v493
    %v496 = vrot.slane %v492, 4
    %vm501 = vcmask 1043456
    %vm502 = vmand %vm501, %vm471
    %v503 = vld [vmem:[#allocation2] sm:$0xf]
    %v504 = vsel %vm502, %v487, %v503
    %505 = vst [vmem:[#allocation2] sm:$0xf] %v504
    %v506 = vld [vmem:[#allocation2 + $0x4] sm:$0x1]
    %v507 = vsel %vm464, %v488, %v506
    %508 = vst [vmem:[#allocation2 + $0x4] sm:$0x1] %v507
    %v509 = vld [vmem:[#allocation2 + $0x8] sm:$0xf]
    %v510 = vsel %vm502, %v495, %v509
    %511 = vst [vmem:[#allocation2 + $0x8] sm:$0xf] %v510
    %v512 = vld [vmem:[#allocation2 + $0xc] sm:$0x1]
    %v513 = vsel %vm464, %v496, %v512
    %514 = vst [vmem:[#allocation2 + $0xc] sm:$0x1] %v513
    %v515 = vld [vmem:[#allocation2] sm:$0xf]
    %v516 = vld [vmem:[#allocation2 + $0x8] sm:$0xf]
    %v517 = vld [vmem:[#allocation7] sm:$0xf]
    %v518 = vld [vmem:[#allocation7 + $0x4] sm:$0xf]
    %v519 = vld [vmem:[#allocation7 + $0x8] sm:$0xf]
    %v520 = vld [vmem:[#allocation7 + $0xc] sm:$0xf]
    %v521 = vld [vmem:[#allocation7 + $0x10] sm:$0xf]
    %v522 = vld [vmem:[#allocation7 + $0x14] sm:$0xf]
    %v523 = vld [vmem:[#allocation7 + $0x18] sm:$0xf]
    %v524 = vld [vmem:[#allocation7 + $0x1c] sm:$0xf]
    %v525 = vld [vmem:[#allocation7 + $0x20] sm:$0xf]
    %v526 = vld [vmem:[#allocation7 + $0x24] sm:$0xf]
    %v527 = vld [vmem:[#allocation7 + $0x28] sm:$0xf]
    %v528 = vld [vmem:[#allocation7 + $0x2c] sm:$0xf]
    %v529 = vld [vmem:[#allocation7 + $0x30] sm:$0xf]
    %v530 = vld [vmem:[#allocation7 + $0x34] sm:$0xf]
    %v531 = vld [vmem:[#allocation7 + $0x38] sm:$0xf]
    %v532 = vld [vmem:[#allocation7 + $0x3c] sm:$0xf]
    %v533 = vld [vmem:[#allocation2 + $0x4] sm:$0x1]
    %v534 = vld [vmem:[#allocation2 + $0xc] sm:$0x1]
    %v536 = vshrl.u32 %v515, 16
    %v538 = vrot.slane %v536, 4
    %v539 = vshll.u32 %v515, 16
    %v541 = vrot.slane %v539, 5
    %v542 = vor.u32 %v538, %v541
    %v543 = vrot.slane %v542, 4
    %v545 = vshll.u32 %v533, 16
    %v547 = vrot.slane %v545, 5
    %v548 = vsel %vm100, %v543, %v547
    %v550 = vshrl.u32 %v516, 16
    %v552 = vrot.slane %v550, 4
    %v553 = vshll.u32 %v516, 16
    %v555 = vrot.slane %v553, 5
    %v556 = vor.u32 %v552, %v555
    %v557 = vrot.slane %v556, 4
    %v559 = vshll.u32 %v534, 16
    %v561 = vrot.slane %v559, 5
    %v562 = vsel %vm100, %v557, %v561
    %v563 = vld [vmem:[#allocation7 + $0x40] sm:$0xf]
    %v564 = vld [vmem:[#allocation7 + $0x44] sm:$0xf]
    %v565 = vld [vmem:[#allocation7 + $0x48] sm:$0xf]
    %v566 = vld [vmem:[#allocation7 + $0x4c] sm:$0xf]
    %v567 = vld [vmem:[#allocation7 + $0x50] sm:$0xf]
    %v568 = vld [vmem:[#allocation7 + $0x54] sm:$0xf]
    %v569 = vld [vmem:[#allocation7 + $0x58] sm:$0xf]
    %v570 = vld [vmem:[#allocation7 + $0x5c] sm:$0xf]
    %v571 = vld [vmem:[#allocation7 + $0x60] sm:$0xf]
    %v572 = vld [vmem:[#allocation7 + $0x64] sm:$0xf]
    %v573 = vld [vmem:[#allocation7 + $0x68] sm:$0xf]
    %v574 = vld [vmem:[#allocation7 + $0x6c] sm:$0xf]
    %v575 = vld [vmem:[#allocation7 + $0x70] sm:$0xf]
    %v576 = vld [vmem:[#allocation7 + $0x74] sm:$0xf]
    %v577 = vld [vmem:[#allocation7 + $0x78] sm:$0xf]
    %v578 = vld [vmem:[#allocation7 + $0x7c] sm:$0xf]
    %v579 = vunpack.c.l.b16 %v548
    %v580 = vunpack.c.l.b16 %v562
    %v581 = vpack.c.b16 %v580, %v579
    %v599 = vunpack.c.l.b16 %v563
    %v600 = vunpack.c.l.b16 %v564
    %v601 = vunpack.c.l.b16 %v565
    %v602 = vunpack.c.l.b16 %v566
    %v603 = vunpack.c.l.b16 %v567
    %v604 = vunpack.c.l.b16 %v568
    %v605 = vunpack.c.l.b16 %v569
    %v606 = vunpack.c.l.b16 %v570
    %v607 = vunpack.c.l.b16 %v571
    %v608 = vunpack.c.l.b16 %v572
    %v609 = vunpack.c.l.b16 %v573
    %v610 = vunpack.c.l.b16 %v574
    %v611 = vunpack.c.l.b16 %v575
    %v612 = vunpack.c.l.b16 %v576
    %v613 = vunpack.c.l.b16 %v577
    %v614 = vunpack.c.l.b16 %v578
    %v615 = vpack.c.b16 %v600, %v599
    %v616 = vpack.c.b16 %v602, %v601
    %v617 = vpack.c.b16 %v604, %v603
    %v618 = vpack.c.b16 %v606, %v605
    %v619 = vpack.c.b16 %v608, %v607
    %v620 = vpack.c.b16 %v610, %v609
    %v621 = vpack.c.b16 %v612, %v611
    %v622 = vpack.c.b16 %v614, %v613
    %631 = vmatpush.bf16.msra.mxu0 %v622
    %632 = vmatpush.bf16.msra.mxu0 %v621
    %633 = vmatpush.bf16.msra.mxu0 %v620
    %634 = vmatpush.bf16.msra.mxu0 %v619
    %635 = vmatpush.bf16.msra.mxu0 %v618
    %636 = vmatpush.bf16.msra.mxu0 %v617
    %637 = vmatpush.bf16.msra.mxu0 %v616
    %638 = vmatpush.bf16.msra.mxu0 %v615
    %639 = vmatmul.bf16.gmra.mxu0 %v581
    %v640 = vpop.f32.mrf.mxu0
    %v641 = vadd.f32 0.0, %v640
    %v642 = vpop.f32.mrf.mxu0
    %v643 = vadd.f32 0.0, %v642
    %644 = vdwg.mxu0
    %v647 = vunpack.c.l.b16 %v515
    %v648 = vunpack.c.l.b16 %v516
    %v649 = vpack.c.b16 %v648, %v647
    %v667 = vunpack.c.l.b16 %v517
    %v668 = vunpack.c.l.b16 %v518
    %v669 = vunpack.c.l.b16 %v519
    %v670 = vunpack.c.l.b16 %v520
    %v671 = vunpack.c.l.b16 %v521
    %v672 = vunpack.c.l.b16 %v522
    %v673 = vunpack.c.l.b16 %v523
    %v674 = vunpack.c.l.b16 %v524
    %v675 = vunpack.c.l.b16 %v525
    %v676 = vunpack.c.l.b16 %v526
    %v677 = vunpack.c.l.b16 %v527
    %v678 = vunpack.c.l.b16 %v528
    %v679 = vunpack.c.l.b16 %v529
    %v680 = vunpack.c.l.b16 %v530
    %v681 = vunpack.c.l.b16 %v531
    %v682 = vunpack.c.l.b16 %v532
    %v683 = vpack.c.b16 %v668, %v667
    %v684 = vpack.c.b16 %v670, %v669
    %v685 = vpack.c.b16 %v672, %v671
    %v686 = vpack.c.b16 %v674, %v673
    %v687 = vpack.c.b16 %v676, %v675
    %v688 = vpack.c.b16 %v678, %v677
    %v689 = vpack.c.b16 %v680, %v679
    %v690 = vpack.c.b16 %v682, %v681
    %699 = vmatpush.bf16.msra.mxu0 %v690
    %700 = vmatpush.bf16.msra.mxu0 %v689
    %701 = vmatpush.bf16.msra.mxu0 %v688
    %702 = vmatpush.bf16.msra.mxu0 %v687
    %703 = vmatpush.bf16.msra.mxu0 %v686
    %704 = vmatpush.bf16.msra.mxu0 %v685
    %705 = vmatpush.bf16.msra.mxu0 %v684
    %706 = vmatpush.bf16.msra.mxu0 %v683
    %707 = vmatmul.bf16.gmra.mxu0 %v649
    %v708 = vpop.f32.mrf.mxu0
    %v709 = vadd.f32 %v641, %v708
    %v710 = vpop.f32.mrf.mxu0
    %v711 = vadd.f32 %v643, %v710
    %712 = vdwg.mxu0
    %v713 = vld [vmem:[#allocation2] sm:$0xe]
    %v714 = vld [vmem:[#allocation2 + $0x8] sm:$0xe]
    %v719 = vrot.slane %v713, 5
    %v720 = vrot.slane %v719, 4
    %v721 = vrot.slane %v533, 5
    %v722 = vsel %vm327, %v720, %v721
    %v723 = vrot.slane %v714, 5
    %v724 = vrot.slane %v723, 4
    %v725 = vrot.slane %v534, 5
    %v726 = vsel %vm327, %v724, %v725
    %v727 = vld [vmem:[#allocation7 + $0x80] sm:$0xf]
    %v728 = vld [vmem:[#allocation7 + $0x84] sm:$0xf]
    %v729 = vld [vmem:[#allocation7 + $0x88] sm:$0xf]
    %v730 = vld [vmem:[#allocation7 + $0x8c] sm:$0xf]
    %v731 = vld [vmem:[#allocation7 + $0x90] sm:$0xf]
    %v732 = vld [vmem:[#allocation7 + $0x94] sm:$0xf]
    %v733 = vld [vmem:[#allocation7 + $0x98] sm:$0xf]
    %v734 = vld [vmem:[#allocation7 + $0x9c] sm:$0xf]
    %v735 = vld [vmem:[#allocation7 + $0xa0] sm:$0xf]
    %v736 = vld [vmem:[#allocation7 + $0xa4] sm:$0xf]
    %v737 = vld [vmem:[#allocation7 + $0xa8] sm:$0xf]
    %v738 = vld [vmem:[#allocation7 + $0xac] sm:$0xf]
    %v739 = vld [vmem:[#allocation7 + $0xb0] sm:$0xf]
    %v740 = vld [vmem:[#allocation7 + $0xb4] sm:$0xf]
    %v741 = vld [vmem:[#allocation7 + $0xb8] sm:$0xf]
    %v742 = vld [vmem:[#allocation7 + $0xbc] sm:$0xf]
    %v743 = vunpack.c.l.b16 %v722
    %v744 = vunpack.c.l.b16 %v726
    %v745 = vpack.c.b16 %v744, %v743
    %v763 = vunpack.c.l.b16 %v727
    %v764 = vunpack.c.l.b16 %v728
    %v765 = vunpack.c.l.b16 %v729
    %v766 = vunpack.c.l.b16 %v730
    %v767 = vunpack.c.l.b16 %v731
    %v768 = vunpack.c.l.b16 %v732
    %v769 = vunpack.c.l.b16 %v733
    %v770 = vunpack.c.l.b16 %v734
    %v771 = vunpack.c.l.b16 %v735
    %v772 = vunpack.c.l.b16 %v736
    %v773 = vunpack.c.l.b16 %v737
    %v774 = vunpack.c.l.b16 %v738
    %v775 = vunpack.c.l.b16 %v739
    %v776 = vunpack.c.l.b16 %v740
    %v777 = vunpack.c.l.b16 %v741
    %v778 = vunpack.c.l.b16 %v742
    %v779 = vpack.c.b16 %v764, %v763
    %v780 = vpack.c.b16 %v766, %v765
    %v781 = vpack.c.b16 %v768, %v767
    %v782 = vpack.c.b16 %v770, %v769
    %v783 = vpack.c.b16 %v772, %v771
    %v784 = vpack.c.b16 %v774, %v773
    %v785 = vpack.c.b16 %v776, %v775
    %v786 = vpack.c.b16 %v778, %v777
    %795 = vmatpush.bf16.msra.mxu0 %v786
    %796 = vmatpush.bf16.msra.mxu0 %v785
    %797 = vmatpush.bf16.msra.mxu0 %v784
    %798 = vmatpush.bf16.msra.mxu0 %v783
    %799 = vmatpush.bf16.msra.mxu0 %v782
    %800 = vmatpush.bf16.msra.mxu0 %v781
    %801 = vmatpush.bf16.msra.mxu0 %v780
    %802 = vmatpush.bf16.msra.mxu0 %v779
    %803 = vmatmul.bf16.gmra.mxu0 %v745
    %v804 = vpop.f32.mrf.mxu0
    %v805 = vadd.f32 0.0, %v804
    %v806 = vpop.f32.mrf.mxu0
    %v807 = vadd.f32 0.0, %v806
    %808 = vdwg.mxu0
    %v809 = vadd.f32 %v709, %v805
    %v810 = vadd.f32 %v711, %v807
    %v812 = vperm.slane %v461, 0
    %v814 = vadd.f32 %v809, %v812
    %v815 = vadd.f32 %v810, %v812
    %v816 = vmax.f32 %v814, 0.0
    %v817 = vmax.f32 %v815, 0.0
    %818 = vst [vmem:[#allocation3] sm:$0xff] %v816
    %819 = vst [vmem:[#allocation3 + $0x8] sm:$0xff] %v817
    %v820 = vld [vmem:[#allocation3] ss:$2 sm:$0xff]
    %v821 = vld [vmem:[%s455] ss:$2 sm:$0xff]
    %v822 = vmax.f32 %v820, %v821
    %v824 = vunpack.c.l.s4 1935823168
    %v825 = vunpack.c.0.s8 %v824
    %v826 = vperm.slane %v822, %v825
    %828 = vst [vmem:[#allocation1] ss:$4 sm:$0xff] %v826
    %v829 = vld.sshfl [vmem:[#allocation1] sm:$0xff pattern:$0x73625140]
    %v830 = vld.sshfl [vmem:[#allocation1 + $0x8] sm:$0xff pattern:$0x73625140]
    %v831 = vld.sshfl [vmem:[#allocation1 + $0x10] sm:$0xff pattern:$0x73625140]
    %v832 = vld.sshfl [vmem:[#allocation1 + $0x18] sm:$0xff pattern:$0x73625140]
    %v837 = vpack.c.bf16 %v829, %v829
    %v838 = vpack.c.bf16 %v830, %v830
    %v839 = vpack.c.bf16 %v831, %v831
    %v840 = vpack.c.bf16 %v832, %v832
    %v841 = vld [vmem:[#allocation9] sm:$0xf]
    %v842 = vld [vmem:[#allocation9 + $0x4] sm:$0xf]
    %v843 = vld [vmem:[#allocation9 + $0x8] sm:$0xf]
    %v844 = vld [vmem:[#allocation9 + $0xc] sm:$0xf]
    %v845 = vld [vmem:[#allocation9 + $0x10] sm:$0xf]
    %v846 = vld [vmem:[#allocation9 + $0x14] sm:$0xf]
    %v847 = vld [vmem:[#allocation9 + $0x18] sm:$0xf]
    %v848 = vld [vmem:[#allocation9 + $0x1c] sm:$0xf]
    %v849 = vld [vmem:[#allocation9 + $0x20] sm:$0xf]
    %v850 = vld [vmem:[#allocation9 + $0x24] sm:$0xf]
    %v851 = vld [vmem:[#allocation9 + $0x28] sm:$0xf]
    %v852 = vld [vmem:[#allocation9 + $0x2c] sm:$0xf]
    %v853 = vld [vmem:[#allocation9 + $0x30] sm:$0xf]
    %v854 = vld [vmem:[#allocation9 + $0x34] sm:$0xf]
    %v855 = vld [vmem:[#allocation9 + $0x38] sm:$0xf]
    %v856 = vld [vmem:[#allocation9 + $0x3c] sm:$0xf]
    %v857 = vld [vmem:[#allocation9 + $0x40] sm:$0xf]
    %v858 = vld [vmem:[#allocation9 + $0x44] sm:$0xf]
    %v859 = vld [vmem:[#allocation9 + $0x48] sm:$0xf]
    %v860 = vld [vmem:[#allocation9 + $0x4c] sm:$0xf]
    %v861 = vld [vmem:[#allocation9 + $0x50] sm:$0xf]
    %v862 = vld [vmem:[#allocation9 + $0x54] sm:$0xf]
    %v863 = vld [vmem:[#allocation9 + $0x58] sm:$0xf]
    %v864 = vld [vmem:[#allocation9 + $0x5c] sm:$0xf]
    %v865 = vld [vmem:[#allocation9 + $0x60] sm:$0xf]
    %v866 = vld [vmem:[#allocation9 + $0x64] sm:$0xf]
    %v867 = vld [vmem:[#allocation9 + $0x68] sm:$0xf]
    %v868 = vld [vmem:[#allocation9 + $0x6c] sm:$0xf]
    %v869 = vld [vmem:[#allocation9 + $0x70] sm:$0xf]
    %v870 = vld [vmem:[#allocation9 + $0x74] sm:$0xf]
    %v871 = vld [vmem:[#allocation9 + $0x78] sm:$0xf]
    %v872 = vld [vmem:[#allocation9 + $0x7c] sm:$0xf]
    %v873 = vld [vmem:[#allocation9 + $0x80] sm:$0xf]
    %v874 = vld [vmem:[#allocation9 + $0x84] sm:$0xf]
    %v875 = vld [vmem:[#allocation9 + $0x88] sm:$0xf]
    %v876 = vld [vmem:[#allocation9 + $0x8c] sm:$0xf]
    %v877 = vld [vmem:[#allocation9 + $0x90] sm:$0xf]
    %v878 = vld [vmem:[#allocation9 + $0x94] sm:$0xf]
    %v879 = vld [vmem:[#allocation9 + $0x98] sm:$0xf]
    %v880 = vld [vmem:[#allocation9 + $0x9c] sm:$0xf]
    %v881 = vld [vmem:[#allocation9 + $0xa0] sm:$0xf]
    %v882 = vld [vmem:[#allocation9 + $0xa4] sm:$0xf]
    %v883 = vld [vmem:[#allocation9 + $0xa8] sm:$0xf]
    %v884 = vld [vmem:[#allocation9 + $0xac] sm:$0xf]
    %v885 = vld [vmem:[#allocation9 + $0xb0] sm:$0xf]
    %v886 = vld [vmem:[#allocation9 + $0xb4] sm:$0xf]
    %v887 = vld [vmem:[#allocation9 + $0xb8] sm:$0xf]
    %v888 = vld [vmem:[#allocation9 + $0xbc] sm:$0xf]
    %v889 = vld [vmem:[#allocation9 + $0xc0] sm:$0xf]
    %v890 = vld [vmem:[#allocation9 + $0xc4] sm:$0xf]
    %v891 = vld [vmem:[#allocation9 + $0xc8] sm:$0xf]
    %v892 = vld [vmem:[#allocation9 + $0xcc] sm:$0xf]
    %v893 = vld [vmem:[#allocation9 + $0xd0] sm:$0xf]
    %v894 = vld [vmem:[#allocation9 + $0xd4] sm:$0xf]
    %v895 = vld [vmem:[#allocation9 + $0xd8] sm:$0xf]
    %v896 = vld [vmem:[#allocation9 + $0xdc] sm:$0xf]
    %v897 = vld [vmem:[#allocation9 + $0xe0] sm:$0xf]
    %v898 = vld [vmem:[#allocation9 + $0xe4] sm:$0xf]
    %v899 = vld [vmem:[#allocation9 + $0xe8] sm:$0xf]
    %v900 = vld [vmem:[#allocation9 + $0xec] sm:$0xf]
    %v901 = vld [vmem:[#allocation9 + $0xf0] sm:$0xf]
    %v902 = vld [vmem:[#allocation9 + $0xf4] sm:$0xf]
    %v903 = vld [vmem:[#allocation9 + $0xf8] sm:$0xf]
    %v904 = vld [vmem:[#allocation9 + $0xfc] sm:$0xf]
    %v905 = vld [vmem:[%s6] sm:$0x1]
    %v907 = vperm.slane %v905, 0
    %v973 = vunpack.c.l.b16 %v841
    %v974 = vunpack.c.l.b16 %v842
    %v975 = vunpack.c.l.b16 %v843
    %v976 = vunpack.c.l.b16 %v844
    %v977 = vunpack.c.l.b16 %v845
    %v978 = vunpack.c.l.b16 %v846
    %v979 = vunpack.c.l.b16 %v847
    %v980 = vunpack.c.l.b16 %v848
    %v981 = vunpack.c.l.b16 %v849
    %v982 = vunpack.c.l.b16 %v850
    %v983 = vunpack.c.l.b16 %v851
    %v984 = vunpack.c.l.b16 %v852
    %v985 = vunpack.c.l.b16 %v853
    %v986 = vunpack.c.l.b16 %v854
    %v987 = vunpack.c.l.b16 %v855
    %v988 = vunpack.c.l.b16 %v856
    %v989 = vunpack.c.l.b16 %v857
    %v990 = vunpack.c.l.b16 %v858
    %v991 = vunpack.c.l.b16 %v859
    %v992 = vunpack.c.l.b16 %v860
    %v993 = vunpack.c.l.b16 %v861
    %v994 = vunpack.c.l.b16 %v862
    %v995 = vunpack.c.l.b16 %v863
    %v996 = vunpack.c.l.b16 %v864
    %v997 = vunpack.c.l.b16 %v865
    %v998 = vunpack.c.l.b16 %v866
    %v999 = vunpack.c.l.b16 %v867
    %v1000 = vunpack.c.l.b16 %v868
    %v1001 = vunpack.c.l.b16 %v869
    %v1002 = vunpack.c.l.b16 %v870
    %v1003 = vunpack.c.l.b16 %v871
    %v1004 = vunpack.c.l.b16 %v872
    %v1005 = vunpack.c.l.b16 %v873
    %v1006 = vunpack.c.l.b16 %v874
    %v1007 = vunpack.c.l.b16 %v875
    %v1008 = vunpack.c.l.b16 %v876
    %v1009 = vunpack.c.l.b16 %v877
    %v1010 = vunpack.c.l.b16 %v878
    %v1011 = vunpack.c.l.b16 %v879
    %v1012 = vunpack.c.l.b16 %v880
    %v1013 = vunpack.c.l.b16 %v881
    %v1014 = vunpack.c.l.b16 %v882
    %v1015 = vunpack.c.l.b16 %v883
    %v1016 = vunpack.c.l.b16 %v884
    %v1017 = vunpack.c.l.b16 %v885
    %v1018 = vunpack.c.l.b16 %v886
    %v1019 = vunpack.c.l.b16 %v887
    %v1020 = vunpack.c.l.b16 %v888
    %v1021 = vunpack.c.l.b16 %v889
    %v1022 = vunpack.c.l.b16 %v890
    %v1023 = vunpack.c.l.b16 %v891
    %v1024 = vunpack.c.l.b16 %v892
    %v1025 = vunpack.c.l.b16 %v893
    %v1026 = vunpack.c.l.b16 %v894
    %v1027 = vunpack.c.l.b16 %v895
    %v1028 = vunpack.c.l.b16 %v896
    %v1029 = vunpack.c.l.b16 %v897
    %v1030 = vunpack.c.l.b16 %v898
    %v1031 = vunpack.c.l.b16 %v899
    %v1032 = vunpack.c.l.b16 %v900
    %v1033 = vunpack.c.l.b16 %v901
    %v1034 = vunpack.c.l.b16 %v902
    %v1035 = vunpack.c.l.b16 %v903
    %v1036 = vunpack.c.l.b16 %v904
    %v1037 = vpack.c.b16 %v974, %v973
    %v1038 = vpack.c.b16 %v976, %v975
    %v1039 = vpack.c.b16 %v978, %v977
    %v1040 = vpack.c.b16 %v980, %v979
    %v1041 = vpack.c.b16 %v982, %v981
    %v1042 = vpack.c.b16 %v984, %v983
    %v1043 = vpack.c.b16 %v986, %v985
    %v1044 = vpack.c.b16 %v988, %v987
    %v1045 = vpack.c.b16 %v990, %v989
    %v1046 = vpack.c.b16 %v992, %v991
    %v1047 = vpack.c.b16 %v994, %v993
    %v1048 = vpack.c.b16 %v996, %v995
    %v1049 = vpack.c.b16 %v998, %v997
    %v1050 = vpack.c.b16 %v1000, %v999
    %v1051 = vpack.c.b16 %v1002, %v1001
    %v1052 = vpack.c.b16 %v1004, %v1003
    %v1053 = vpack.c.b16 %v1006, %v1005
    %v1054 = vpack.c.b16 %v1008, %v1007
    %v1055 = vpack.c.b16 %v1010, %v1009
    %v1056 = vpack.c.b16 %v1012, %v1011
    %v1057 = vpack.c.b16 %v1014, %v1013
    %v1058 = vpack.c.b16 %v1016, %v1015
    %v1059 = vpack.c.b16 %v1018, %v1017
    %v1060 = vpack.c.b16 %v1020, %v1019
    %v1061 = vpack.c.b16 %v1022, %v1021
    %v1062 = vpack.c.b16 %v1024, %v1023
    %v1063 = vpack.c.b16 %v1026, %v1025
    %v1064 = vpack.c.b16 %v1028, %v1027
    %v1065 = vpack.c.b16 %v1030, %v1029
    %v1066 = vpack.c.b16 %v1032, %v1031
    %v1067 = vpack.c.b16 %v1034, %v1033
    %v1068 = vpack.c.b16 %v1036, %v1035
    %1101 = vmatpush.bf16.msra.mxu0 %v1044
    %1102 = vmatpush.bf16.msra.mxu0 %v1043
    %1103 = vmatpush.bf16.msra.mxu0 %v1042
    %1104 = vmatpush.bf16.msra.mxu0 %v1041
    %1105 = vmatpush.bf16.msra.mxu0 %v1040
    %1106 = vmatpush.bf16.msra.mxu0 %v1039
    %1107 = vmatpush.bf16.msra.mxu0 %v1038
    %1108 = vmatpush.bf16.msra.mxu0 %v1037
    %1109 = vmatmul.bf16.gmra.mxu0 %v837
    %v1110 = vpop.f32.mrf.mxu0
    %v1111 = vadd.f32 %v907, %v1110
    %v1112 = vpop.f32.mrf.mxu0
    %1113 = vdwg.mxu0
    %1114 = vmatpush.bf16.msra.mxu0 %v1052
    %1115 = vmatpush.bf16.msra.mxu0 %v1051
    %1116 = vmatpush.bf16.msra.mxu0 %v1050
    %1117 = vmatpush.bf16.msra.mxu0 %v1049
    %1118 = vmatpush.bf16.msra.mxu0 %v1048
    %1119 = vmatpush.bf16.msra.mxu0 %v1047
    %1120 = vmatpush.bf16.msra.mxu0 %v1046
    %1121 = vmatpush.bf16.msra.mxu0 %v1045
    %1122 = vmatmul.bf16.gmra.mxu0 %v838
    %v1123 = vpop.f32.mrf.mxu0
    %v1124 = vadd.f32 %v1111, %v1123
    %v1125 = vpop.f32.mrf.mxu0
    %1126 = vdwg.mxu0
    %1127 = vmatpush.bf16.msra.mxu0 %v1060
    %1128 = vmatpush.bf16.msra.mxu0 %v1059
    %1129 = vmatpush.bf16.msra.mxu0 %v1058
    %1130 = vmatpush.bf16.msra.mxu0 %v1057
    %1131 = vmatpush.bf16.msra.mxu0 %v1056
    %1132 = vmatpush.bf16.msra.mxu0 %v1055
    %1133 = vmatpush.bf16.msra.mxu0 %v1054
    %1134 = vmatpush.bf16.msra.mxu0 %v1053
    %1135 = vmatmul.bf16.gmra.mxu0 %v839
    %v1136 = vpop.f32.mrf.mxu0
    %v1137 = vadd.f32 %v1124, %v1136
    %v1138 = vpop.f32.mrf.mxu0
    %1139 = vdwg.mxu0
    %1140 = vmatpush.bf16.msra.mxu0 %v1068
    %1141 = vmatpush.bf16.msra.mxu0 %v1067
    %1142 = vmatpush.bf16.msra.mxu0 %v1066
    %1143 = vmatpush.bf16.msra.mxu0 %v1065
    %1144 = vmatpush.bf16.msra.mxu0 %v1064
    %1145 = vmatpush.bf16.msra.mxu0 %v1063
    %1146 = vmatpush.bf16.msra.mxu0 %v1062
    %1147 = vmatpush.bf16.msra.mxu0 %v1061
    %1148 = vmatmul.bf16.gmra.mxu0 %v840
    %v1149 = vpop.f32.mrf.mxu0
    %v1150 = vadd.f32 %v1137, %v1149
    %v1151 = vpop.f32.mrf.mxu0
    %1152 = vdwg.mxu0
    %1153 = vst [vmem:[#allocation10] sm:$0x3] %v1150
    // Predicated region
    $region42: #{tpu_custom_call.1} parent=1 // pred_check
      _
    $region43: #{tpu_custom_call.1} parent=1 // pred_check_branch
      %1155 = sbr.rel (0) target = $region45
    $region44: #{tpu_custom_call.1} parent=1 // pred_region
      %1157 = vsyncadd [#allocation6], 0
      %s1159 = sshll.u32 [#allocation10], 4
      %s1160 = int_to_ptr.vmem [resolvable:$true] %s1159
      %s1161 = sshll.u32 %s7, 4
      %s1162 = int_to_ptr.hbm [resolvable:$true] %s1161
      %1164 = dma.vmem_to_hbm [thread:$0]  %s1160, 32, %s1162, [#allocation6]
    $region45: #{tpu_custom_call.1} parent=1 // pred_fallthru
      _
    // Predicated region
    $region46: #{tpu_custom_call.1} parent=1 // pred_check
      _
    $region47: #{tpu_custom_call.1} parent=1 // pred_check_branch
      %1166 = sbr.rel (0) target = $region49
    $region48: #{tpu_custom_call.1} parent=1 // pred_region
      %1168 = dma.done [#allocation6], 32
    $region49: #{tpu_custom_call.1} parent=1 // pred_fallthru
      _
    %1169 = vsyncpa [#allocation5], 1
    %1170 = vsyncpa [#allocation8], 1
    %1171 = vsyncpa [#allocation6], 1

</llo_original>
